<compile_context>
chip_gen: v7x
topology: tpu7x:2x2x1
jax: 0.10.0
libtpu: 0.0.40
codegen_flags: <defaults>
</compile_context>

<pallas_src>
import jax
import jax.numpy as jnp
from jax import lax
from jax.experimental import pallas as pl
from jax.experimental.pallas import tpu as pltpu

# ---- module hyper-parameters (synthetic, deterministic) --------------------
PPO_NETWORK_INPUT_SIZE = 32
PREDICTION_NETWORK_OUTPUT_SIZE = 16
USE_PREDICTION = True

OBS_HIDDEN = 64                                   # ObservationEncoder output
FUSION_SIZE = (OBS_HIDDEN + PREDICTION_NETWORK_OUTPUT_SIZE
               if USE_PREDICTION else OBS_HIDDEN)
HIDDEN_SIZE = 64
OUTPUT_SIZE = 1

IN_COLS = PPO_NETWORK_INPUT_SIZE + PREDICTION_NETWORK_OUTPUT_SIZE   # 48 packed input
Y_COLS = 2 * HIDDEN_SIZE                                            # 128 fused stage-1

MAX_TILE = 8192                          # per-tile VMEM ~= tb * 2 KiB -> ~16 MiB
VMEM_LIMIT_BYTES = 32 * 1024 * 1024      # safe on v5e (128 MiB), v6e (128), v7x (64)


def _cdiv(a, b):
    return -(-a // b)


def _round_up(x, m):
    return ((x + m - 1) // m) * m


# ---- Pallas kernel ----------------------------------------------------------
def critic_kernel(x_ref, w1_ref, w2_ref, misc_ref, out_ref):
    # Stage 1 (fused encoder + belief path), one block-diagonal MXU issue:
    #   y = [obs | belief] @ [[w_obs, 0], [0, w1_bel]] + [b_obs | b1]
    y = jnp.dot(x_ref[...], w1_ref[...], preferred_element_type=jnp.float32)
    y = y + misc_ref[0:1, :]

    # ReLU only on the encoder half (lanes < 64); the belief contribution
    # (already carrying b1) must pass through un-clipped.
    lane = lax.broadcasted_iota(jnp.int32, y.shape, 1)
    y = jnp.where(lane < OBS_HIDDEN, jnp.maximum(y, 0.0), y)

    # Stage 2: h = relu( y @ [w1_obs ; I64] )
    #            == relu( enc @ w1[:64] + belief @ w1[64:] + b1 )
    h = jnp.maximum(
        jnp.dot(y, w2_ref[...], preferred_element_type=jnp.float32), 0.0)

    # dropout1: eval-mode identity.
    # TODO(synk): training-mode dropout (pltpu.prng_seed + prng_random_bits mask).

    # fc2, laid out lane-dense as a (1, tb) output row: w2_row . h^T + b2
    w2_row = misc_ref[1:2, 0:HIDDEN_SIZE]            # (1, 64)  == fc2 weight
    b2 = misc_ref[2:3, 0:1]                          # (1, 1)
    out_ref[...] = lax.dot_general(
        w2_row, h,
        dimension_numbers=(((1,), (1,)), ((), ())),
        preferred_element_type=jnp.float32) + b2


# ---- wrapper -----------------------------------------------------------------
def critic_forward(obs, encoded_belief, params, *, max_tile=MAX_TILE):
    B = obs.shape[0]

    # One packed streamed slab: [obs | belief]  (B, 48).
    x = jnp.concatenate([obs, encoded_belief], axis=1).astype(jnp.float32)

    if B <= max_tile:
        n_tiles = 1
        tb = B                      # single full-extent tile, no padding at all
        padded_b = B
    else:
        n_tiles = _cdiv(B, max_tile)
        if n_tiles % 2:             # even grid -> both v7x TensorCores busy
            n_tiles += 1
        tb = _round_up(_cdiv(B, n_tiles), 128)   # lane-dense output blocks
        padded_b = n_tiles * tb
        if padded_b != B:           # tiny pad, fused next to the packing copy
            x = jnp.pad(x, ((0, padded_b - B), (0, 0)))

    out_row = pl.pallas_call(
        critic_kernel,
        out_shape=jax.ShapeDtypeStruct((1, padded_b), jnp.float32),
        grid=(n_tiles,),
        in_specs=[
            pl.BlockSpec((tb, IN_COLS), lambda i: (i, 0)),
            # Packed params: constant block index -> fetched once, VMEM-resident.
            pl.BlockSpec((IN_COLS, Y_COLS), lambda i: (0, 0)),
            pl.BlockSpec((Y_COLS, HIDDEN_SIZE), lambda i: (0, 0)),
            pl.BlockSpec((8, Y_COLS), lambda i: (0, 0)),
        ],
        out_specs=pl.BlockSpec((1, tb), lambda i: (0, i)),
        compiler_params=pltpu.CompilerParams(
            dimension_semantics=("parallel",),
            vmem_limit_bytes=VMEM_LIMIT_BYTES),
    )(x, params["w_blk1"], params["w_blk2"], params["misc"])

    return out_row[0, :B].reshape(B, OUTPUT_SIZE)


# ---- deterministic parameter init (PyTorch-style uniform +-1/sqrt(fan_in)) ---
def init_params(key):
    ks = jax.random.split(key, 6)

    def linear(kw, kb, fan_in, fan_out):
        bound = 1.0 / float(fan_in) ** 0.5
        w = jax.random.uniform(kw, (fan_in, fan_out), jnp.float32, -bound, bound)
        b = jax.random.uniform(kb, (1, fan_out), jnp.float32, -bound, bound)
        return w, b

    w_obs, b_obs = linear(ks[0], ks[1], PPO_NETWORK_INPUT_SIZE, OBS_HIDDEN)
    w1, b1 = linear(ks[2], ks[3], FUSION_SIZE, HIDDEN_SIZE)
    w2, b2 = linear(ks[4], ks[5], HIDDEN_SIZE, OUTPUT_SIZE)

    # Stage-1 block-diagonal weight: [[w_obs, 0], [0, w1_bel]]  (48, 128)
    w_blk1 = jnp.zeros((IN_COLS, Y_COLS), jnp.float32)
    w_blk1 = w_blk1.at[:PPO_NETWORK_INPUT_SIZE, :OBS_HIDDEN].set(w_obs)
    w_blk1 = w_blk1.at[PPO_NETWORK_INPUT_SIZE:, OBS_HIDDEN:].set(w1[OBS_HIDDEN:])

    # Stage-2 weight: [w1_obs ; I64]  (128, 64)
    w_blk2 = jnp.concatenate(
        [w1[:OBS_HIDDEN], jnp.eye(HIDDEN_SIZE, dtype=jnp.float32)], axis=0)

    # Misc row-pack: row0 = [b_obs | b1], row1 = [w2^T | 0], row2 = [b2, 0, ...]
    misc = jnp.zeros((8, Y_COLS), jnp.float32)
    misc = misc.at[0, :OBS_HIDDEN].set(b_obs[0])
    misc = misc.at[0, OBS_HIDDEN:].set(b1[0])
    misc = misc.at[1, :HIDDEN_SIZE].set(w2[:, 0])
    misc = misc.at[2, 0].set(b2[0, 0])

    return {
        "w_blk1": w_blk1, "w_blk2": w_blk2, "misc": misc,
        # unpacked copies for the pure-JAX reference
        "w_obs": w_obs, "b_obs": b_obs,
        "w1": w1, "b1": b1,
        "w2": w2, "b2": b2,
    }


# ---- pure-JAX reference for sanity ------------------------------------------
def critic_ref(obs, belief, p):
    enc = jnp.maximum(obs @ p["w_obs"] + p["b_obs"], 0.0)
    fused = jnp.concatenate([enc, belief], axis=1)
    h = jnp.maximum(fused @ p["w1"] + p["b1"], 0.0)
    return h @ p["w2"] + p["b2"]


if __name__ == "__main__":
    key = jax.random.PRNGKey(0)
    k_obs, k_bel, k_par = jax.random.split(key, 3)
    params = init_params(k_par)

    # Small-batch (latency) path: single full-extent tile, grid of 1, no padding.
    B = 8
    obs = jax.random.normal(k_obs, (B, PPO_NETWORK_INPUT_SIZE), jnp.float32)
    belief = jax.random.normal(
        k_bel, (B, PREDICTION_NETWORK_OUTPUT_SIZE), jnp.float32)
    out = jax.block_until_ready(critic_forward(obs, belief, params))
    ref = critic_ref(obs, belief, params)
    assert out.shape == (B, OUTPUT_SIZE)
    assert jnp.allclose(out, ref, atol=1e-4, rtol=1e-4)

    # Multi-tile path (grid > 1, even grid, 128-aligned tiles, small tail pad),
    # exercised at a small shape by lowering max_tile.
    B2 = 1000
    obs2 = jax.random.normal(k_obs, (B2, PPO_NETWORK_INPUT_SIZE), jnp.float32)
    belief2 = jax.random.normal(
        k_bel, (B2, PREDICTION_NETWORK_OUTPUT_SIZE), jnp.float32)
    out2 = jax.block_until_ready(
        critic_forward(obs2, belief2, params, max_tile=256))
    ref2 = critic_ref(obs2, belief2, params)
    assert out2.shape == (B2, OUTPUT_SIZE)
    assert jnp.allclose(out2, ref2, atol=1e-4, rtol=1e-4)

    print("KERNEL_OK")
</pallas_src>

<mosaic_0001>
module attributes {stable_mosaic.version = 11 : i64} {
  func.func @critic_kernel(%arg0: i32, %arg1: memref<8x48xf32, #tpu.memory_space<vmem>>, %arg2: memref<48x128xf32, #tpu.memory_space<vmem>>, %arg3: memref<128x64xf32, #tpu.memory_space<vmem>>, %arg4: memref<8x128xf32, #tpu.memory_space<vmem>>, %arg5: memref<1x8xf32, #tpu.memory_space<vmem>>) attributes {dimension_semantics = [#tpu.dimension_semantics<parallel>], iteration_bounds = array<i64: 1>, scalar_prefetch = 0 : i64, scratch_operands = 0 : i64, tpu.core_type = #tpu.core_type<tc>, window_params = [{transform_indices = @transform_0, window_bounds = array<i64: 8, 48>}, {pipeline_mode = #tpu.pipeline_mode<synchronous>, transform_indices = @transform_1, window_bounds = array<i64: 48, 128>}, {pipeline_mode = #tpu.pipeline_mode<synchronous>, transform_indices = @transform_2, window_bounds = array<i64: 128, 64>}, {pipeline_mode = #tpu.pipeline_mode<synchronous>, transform_indices = @transform_3, window_bounds = array<i64: 8, 128>}, {transform_indices = @transform_4, window_bounds = array<i64: 1, 8>}]} {
    %c0 = arith.constant 0 : index
    %c0_0 = arith.constant 0 : index
    %0 = vector.load %arg1[%c0, %c0_0] : memref<8x48xf32, #tpu.memory_space<vmem>>, vector<8x48xf32>
    %c0_1 = arith.constant 0 : index
    %c0_2 = arith.constant 0 : index
    %1 = vector.load %arg2[%c0_1, %c0_2] : memref<48x128xf32, #tpu.memory_space<vmem>>, vector<48x128xf32>
    %cst = arith.constant dense<0.000000e+00> : vector<8x128xf32>
    %2 = tpu.matmul %0, %1, %cst {dimension_numbers = #tpu.dot_dimension_numbers<[1], [0], [0], [1], [0, 0, 1, 1], [], []>} : vector<8x48xf32>, vector<48x128xf32>, vector<8x128xf32> -> vector<8x128xf32>
    %c0_3 = arith.constant 0 : index
    %c0_4 = arith.constant 0 : index
    %3 = vector.load %arg4[%c0_3, %c0_4] : memref<8x128xf32, #tpu.memory_space<vmem>>, vector<1x128xf32>
    %4 = vector.broadcast %3 : vector<1x128xf32> to vector<8x128xf32>
    %5 = arith.addf %2, %4 : vector<8x128xf32>
    %6 = tpu.iota {dimensions = array<i32: 1>} : vector<8x128xi32>
    %c64_i32 = arith.constant 64 : i32
    %7 = vector.broadcast %c64_i32 : i32 to vector<8x128xi32>
    %8 = arith.cmpi slt, %6, %7 : vector<8x128xi32>
    %cst_5 = arith.constant 0.000000e+00 : f32
    %9 = vector.broadcast %cst_5 : f32 to vector<8x128xf32>
    %10 = arith.maximumf %5, %9 : vector<8x128xf32>
    %11 = arith.select %8, %10, %5 : vector<8x128xi1>, vector<8x128xf32>
    %c0_6 = arith.constant 0 : index
    %c0_7 = arith.constant 0 : index
    %12 = vector.load %arg3[%c0_6, %c0_7] : memref<128x64xf32, #tpu.memory_space<vmem>>, vector<128x64xf32>
    %cst_8 = arith.constant dense<0.000000e+00> : vector<8x64xf32>
    %13 = tpu.matmul %11, %12, %cst_8 {dimension_numbers = #tpu.dot_dimension_numbers<[1], [0], [0], [1], [0, 0, 1, 1], [], []>} : vector<8x128xf32>, vector<128x64xf32>, vector<8x64xf32> -> vector<8x64xf32>
    %cst_9 = arith.constant 0.000000e+00 : f32
    %14 = vector.broadcast %cst_9 : f32 to vector<8x64xf32>
    %15 = arith.maximumf %13, %14 : vector<8x64xf32>
    %c1 = arith.constant 1 : index
    %c0_10 = arith.constant 0 : index
    %16 = vector.load %arg4[%c1, %c0_10] : memref<8x128xf32, #tpu.memory_space<vmem>>, vector<1x64xf32>
    %c2 = arith.constant 2 : index
    %c0_11 = arith.constant 0 : index
    %17 = vector.load %arg4[%c2, %c0_11] : memref<8x128xf32, #tpu.memory_space<vmem>>, vector<1x1xf32>
    %cst_12 = arith.constant dense<0.000000e+00> : vector<1x8xf32>
    %18 = tpu.matmul %16, %15, %cst_12 {dimension_numbers = #tpu.dot_dimension_numbers<[1], [1], [0], [0], [0, 0, 1, 0], [], []>} : vector<1x64xf32>, vector<8x64xf32>, vector<1x8xf32> -> vector<1x8xf32>
    %19 = vector.broadcast %17 : vector<1x1xf32> to vector<1x8xf32>
    %20 = arith.addf %18, %19 : vector<1x8xf32>
    %c0_13 = arith.constant 0 : index
    %c0_14 = arith.constant 0 : index
    %21 = vector.load %arg5[%c0_13, %c0_14] : memref<1x8xf32, #tpu.memory_space<vmem>>, vector<1x8xf32>
    tpu.vector_store %arg5[%c0_13, %c0_14], %20 {strides = array<i32>} : memref<1x8xf32, #tpu.memory_space<vmem>>, vector<1x8xf32>,
    return
  }
  func.func @transform_0(%arg0: i32) -> (i32, i32) {
    %c0_i32 = arith.constant 0 : i32
    %c0_i32_0 = arith.constant 0 : i32
    return %arg0, %c0_i32 : i32, i32
  }
  func.func @transform_1(%arg0: i32) -> (i32, i32) {
    %c0_i32 = arith.constant 0 : i32
    %c0_i32_0 = arith.constant 0 : i32
    %c0_i32_1 = arith.constant 0 : i32
    return %c0_i32, %c0_i32_0 : i32, i32
  }
  func.func @transform_2(%arg0: i32) -> (i32, i32) {
    %c0_i32 = arith.constant 0 : i32
    %c0_i32_0 = arith.constant 0 : i32
    %c0_i32_1 = arith.constant 0 : i32
    return %c0_i32, %c0_i32_0 : i32, i32
  }
  func.func @transform_3(%arg0: i32) -> (i32, i32) {
    %c0_i32 = arith.constant 0 : i32
    %c0_i32_0 = arith.constant 0 : i32
    %c0_i32_1 = arith.constant 0 : i32
    return %c0_i32, %c0_i32_0 : i32, i32
  }
  func.func @transform_4(%arg0: i32) -> (i32, i32) {
    %c0_i32 = arith.constant 0 : i32
    %c0_i32_0 = arith.constant 0 : i32
    return %c0_i32, %arg0 : i32, i32
  }
}

</mosaic_0001>

<llo_original>
// kernel: tpu_custom_call.1
$region0: #{tpu_custom_call.1}
  #allocation0 [shape = 'u32[]', space=smem, size = 0x4, offset = 0x4, fixed_abs, tag = 'smem constant byte address 0x4 - core index']
  #allocation1 [shape = 'u32[144,128]{1,0:T(1,128)}', space=vmem, size = 0x12000, scoped, tag = 'internal scratch']
  %s0 = inlined_call_operand.vmem [shape: f32[8,48], index: 0, kind: input, shape index: {}]
  %s1 = inlined_call_operand.vmem [shape: f32[48,128], index: 1, kind: input, shape index: {}]
  %s2 = inlined_call_operand.vmem [shape: f32[128,64], index: 2, kind: input, shape index: {}]
  %s3 = inlined_call_operand.vmem [shape: f32[8,128], index: 3, kind: input, shape index: {}]
  %s4 = inlined_call_operand.hbm [shape: f32[1,8], index: 4, kind: output, shape index: {}]
  %s5 = sld [smem:[#allocation0]]
  $region26: #{tpu_custom_call.1} parent=0
    _
  %s7 = ssub.s32 1, %s5
  %s8 = scalar_select 0, %s7, %s5
  $region1: #{tpu_custom_call.1} parent=0
    #allocation2 [shape = 'u8[512]{0}', space=vmem, size = 0x400, scoped, tag = 'output window, operand 0, single buffered']
    #allocation3 [shape = 's32[1]{0}', space=sflag, size = 0x4, scoped, tag = 'scoped memory for tpu_custom_call.1']
    %9 = vsyncpa [#allocation3], 0
    // Predicated region
    $region2: #{tpu_custom_call.1} parent=1 // pred_check
      _
    $region3: #{tpu_custom_call.1} parent=1 // pred_check_branch
      %11 = sbr.rel (0) target = $region5
    $region4: #{tpu_custom_call.1} parent=1 // pred_region
      _
    $region5: #{tpu_custom_call.1} parent=1 // pred_fallthru
      _
    // Predicated region
    $region6: #{tpu_custom_call.1} parent=1 // pred_check
      _
    $region7: #{tpu_custom_call.1} parent=1 // pred_check_branch
      %13 = sbr.rel (0) target = $region9
    $region8: #{tpu_custom_call.1} parent=1 // pred_region
      _
    $region9: #{tpu_custom_call.1} parent=1 // pred_fallthru
      _
    // Predicated region
    $region10: #{tpu_custom_call.1} parent=1 // pred_check
      _
    $region11: #{tpu_custom_call.1} parent=1 // pred_check_branch
      %15 = sbr.rel (0) target = $region13
    $region12: #{tpu_custom_call.1} parent=1 // pred_region
      _
    $region13: #{tpu_custom_call.1} parent=1 // pred_fallthru
      _
    // Predicated region
    $region14: #{tpu_custom_call.1} parent=1 // pred_check
      _
    $region15: #{tpu_custom_call.1} parent=1 // pred_check_branch
      %17 = sbr.rel (0) target = $region17
    $region16: #{tpu_custom_call.1} parent=1 // pred_region
      _
    $region17: #{tpu_custom_call.1} parent=1 // pred_fallthru
      _
    %v18 = vld [vmem:[%s0] sm:$0xff]
    %v19 = vld [vmem:[%s1] sm:$0xff]
    %v20 = vld [vmem:[%s1 + $0x8] sm:$0xff]
    %v21 = vld [vmem:[%s1 + $0x10] sm:$0xff]
    %v22 = vld [vmem:[%s1 + $0x18] sm:$0xff]
    %v23 = vld [vmem:[%s1 + $0x20] sm:$0xff]
    %v24 = vld [vmem:[%s1 + $0x28] sm:$0xff]
    %v25 = vld [vmem:[%s3] sm:$0x1]
    %v26 = vlaneseq
    %v27 = vshrl.u32 %v26, 7
    %v28 = vsub.s32 0, %v27
    %v29 = vrot.slane %v25, %v28
    %vm30 = vcmask 392192
    %v32 = vsel %vm30, %v18, 0
    %34 = vmatprep.subr.mxu0 0.0
    %35 = vmatpush1.msra.mxu0 %v19
    %36 = vmatprep.subr.mxu0 0.0
    %37 = vmatpush1.msra.mxu0 %v20
    %38 = vmatprep.subr.mxu0 0.0
    %39 = vmatpush1.msra.mxu0 %v21
    %40 = vmatprep.subr.mxu0 0.0
    %41 = vmatpush1.msra.mxu0 %v22
    %42 = vmatprep.subr.mxu0 0.0
    %43 = vmatpush1.msra.mxu0 %v23
    %44 = vmatprep.subr.mxu0 0.0
    %45 = vmatpush1.msra.mxu0 %v24
    %46 = vmatprep.subr.mxu0 0.0
    %47 = vmatpush1.msra.mxu0 0.0
    %48 = vmatprep.subr.mxu0 0.0
    %49 = vmatpush1.msra.mxu0 0.0
    %50 = vmatprep.subr.mxu0 0.0
    %51 = vmatpush1.msra.mxu0 0.0
    %52 = vmatprep.subr.mxu0 0.0
    %53 = vmatpush1.msra.mxu0 0.0
    %54 = vmatprep.subr.mxu0 0.0
    %55 = vmatpush1.msra.mxu0 0.0
    %56 = vmatprep.subr.mxu0 0.0
    %57 = vmatpush1.msra.mxu0 0.0
    %58 = vmatprep.subr.mxu0 0.0
    %59 = vmatpush1.msra.mxu0 0.0
    %60 = vmatprep.subr.mxu0 0.0
    %61 = vmatpush1.msra.mxu0 0.0
    %62 = vmatprep.subr.mxu0 0.0
    %63 = vmatpush1.msra.mxu0 0.0
    %64 = vmatprep.subr.mxu0 0.0
    %65 = vmatpush1.msra.mxu0 0.0
    %66 = vmatprep.subr.mxu0 0.0
    %67 = vmatpush1.msra.mxu0 0.0
    %68 = vmatprep.subr.mxu0 0.0
    %69 = vmatpush1.msra.mxu0 0.0
    %70 = vmatprep.subr.mxu0 0.0
    %71 = vmatpush1.msra.mxu0 0.0
    %72 = vmatprep.subr.mxu0 0.0
    %73 = vmatpush1.msra.mxu0 0.0
    %74 = vmatprep.subr.mxu0 0.0
    %75 = vmatpush1.msra.mxu0 0.0
    %76 = vmatprep.subr.mxu0 0.0
    %77 = vmatpush1.msra.mxu0 0.0
    %78 = vmatprep.subr.mxu0 0.0
    %79 = vmatpush1.msra.mxu0 0.0
    %80 = vmatprep.subr.mxu0 0.0
    %81 = vmatpush1.msra.mxu0 0.0
    %82 = vmatprep.subr.mxu0 0.0
    %83 = vmatpush1.msra.mxu0 0.0
    %84 = vmatprep.subr.mxu0 0.0
    %85 = vmatpush1.msra.mxu0 0.0
    %86 = vmatprep.subr.mxu0 0.0
    %87 = vmatpush1.msra.mxu0 0.0
    %88 = vmatprep.subr.mxu0 0.0
    %89 = vmatpush1.msra.mxu0 0.0
    %90 = vmatprep.subr.mxu0 0.0
    %91 = vmatpush1.msra.mxu0 0.0
    %92 = vmatprep.subr.mxu0 0.0
    %93 = vmatpush1.msra.mxu0 0.0
    %94 = vmatprep.subr.mxu0 0.0
    %95 = vmatpush1.msra.mxu0 0.0
    %96 = vmatprep.subr.mxu0 0.0
    %97 = vmatpush1.msra.mxu0 0.0
    %98 = vmatprep.mubr.f32.mxu0 0.0
    %99 = vmatmul.mubr.f32.gmra.mrb[0].mxu0 %v32
    %v100 = vpop.f32.mrb[0].mxu0
    %v101 = vadd.f32 %v29, %v100
    %v102 = vpop.f32.mrb[0].mxu0
    %103 = vdwg.mxu0
    %v104 = vlaneseq
    %v105 = vand.u32 %v104, 127
    %vm106 = vcmp.lt.s32.totalorder %v105, 64
    %v107 = vmax.f32 %v101, 0.0
    %v108 = vsel %vm106, %v107, %v101
    %v109 = vld [vmem:[%s2] sm:$0xff]
    %v110 = vld [vmem:[%s2 + $0x8] sm:$0xff]
    %v111 = vld [vmem:[%s2 + $0x10] sm:$0xff]
    %v112 = vld [vmem:[%s2 + $0x18] sm:$0xff]
    %v113 = vld [vmem:[%s2 + $0x20] sm:$0xff]
    %v114 = vld [vmem:[%s2 + $0x28] sm:$0xff]
    %v115 = vld [vmem:[%s2 + $0x30] sm:$0xff]
    %v116 = vld [vmem:[%s2 + $0x38] sm:$0xff]
    %v117 = vld [vmem:[%s2 + $0x40] sm:$0xff]
    %v118 = vld [vmem:[%s2 + $0x48] sm:$0xff]
    %v119 = vld [vmem:[%s2 + $0x50] sm:$0xff]
    %v120 = vld [vmem:[%s2 + $0x58] sm:$0xff]
    %v121 = vld [vmem:[%s2 + $0x60] sm:$0xff]
    %v122 = vld [vmem:[%s2 + $0x68] sm:$0xff]
    %v123 = vld [vmem:[%s2 + $0x70] sm:$0xff]
    %v124 = vld [vmem:[%s2 + $0x78] sm:$0xff]
    %125 = vmatprep.subr.mxu0 0.0
    %126 = vmatpush1.msra.mxu0 %v109
    %127 = vmatprep.subr.mxu0 0.0
    %128 = vmatpush1.msra.mxu0 %v110
    %129 = vmatprep.subr.mxu0 0.0
    %130 = vmatpush1.msra.mxu0 %v111
    %131 = vmatprep.subr.mxu0 0.0
    %132 = vmatpush1.msra.mxu0 %v112
    %133 = vmatprep.subr.mxu0 0.0
    %134 = vmatpush1.msra.mxu0 %v113
    %135 = vmatprep.subr.mxu0 0.0
    %136 = vmatpush1.msra.mxu0 %v114
    %137 = vmatprep.subr.mxu0 0.0
    %138 = vmatpush1.msra.mxu0 %v115
    %139 = vmatprep.subr.mxu0 0.0
    %140 = vmatpush1.msra.mxu0 %v116
    %141 = vmatprep.subr.mxu0 0.0
    %142 = vmatpush1.msra.mxu0 %v117
    %143 = vmatprep.subr.mxu0 0.0
    %144 = vmatpush1.msra.mxu0 %v118
    %145 = vmatprep.subr.mxu0 0.0
    %146 = vmatpush1.msra.mxu0 %v119
    %147 = vmatprep.subr.mxu0 0.0
    %148 = vmatpush1.msra.mxu0 %v120
    %149 = vmatprep.subr.mxu0 0.0
    %150 = vmatpush1.msra.mxu0 %v121
    %151 = vmatprep.subr.mxu0 0.0
    %152 = vmatpush1.msra.mxu0 %v122
    %153 = vmatprep.subr.mxu0 0.0
    %154 = vmatpush1.msra.mxu0 %v123
    %155 = vmatprep.subr.mxu0 0.0
    %156 = vmatpush1.msra.mxu0 %v124
    %157 = vmatprep.subr.mxu0 0.0
    %158 = vmatpush1.msra.mxu0 0.0
    %159 = vmatprep.subr.mxu0 0.0
    %160 = vmatpush1.msra.mxu0 0.0
    %161 = vmatprep.subr.mxu0 0.0
    %162 = vmatpush1.msra.mxu0 0.0
    %163 = vmatprep.subr.mxu0 0.0
    %164 = vmatpush1.msra.mxu0 0.0
    %165 = vmatprep.subr.mxu0 0.0
    %166 = vmatpush1.msra.mxu0 0.0
    %167 = vmatprep.subr.mxu0 0.0
    %168 = vmatpush1.msra.mxu0 0.0
    %169 = vmatprep.subr.mxu0 0.0
    %170 = vmatpush1.msra.mxu0 0.0
    %171 = vmatprep.subr.mxu0 0.0
    %172 = vmatpush1.msra.mxu0 0.0
    %173 = vmatprep.subr.mxu0 0.0
    %174 = vmatpush1.msra.mxu0 0.0
    %175 = vmatprep.subr.mxu0 0.0
    %176 = vmatpush1.msra.mxu0 0.0
    %177 = vmatprep.subr.mxu0 0.0
    %178 = vmatpush1.msra.mxu0 0.0
    %179 = vmatprep.subr.mxu0 0.0
    %180 = vmatpush1.msra.mxu0 0.0
    %181 = vmatprep.subr.mxu0 0.0
    %182 = vmatpush1.msra.mxu0 0.0
    %183 = vmatprep.subr.mxu0 0.0
    %184 = vmatpush1.msra.mxu0 0.0
    %185 = vmatprep.subr.mxu0 0.0
    %186 = vmatpush1.msra.mxu0 0.0
    %187 = vmatprep.subr.mxu0 0.0
    %188 = vmatpush1.msra.mxu0 0.0
    %189 = vmatprep.mubr.f32.mxu0 0.0
    %190 = vmatmul.mubr.f32.gmra.mrb[0].mxu0 %v108
    %v191 = vpop.f32.mrb[0].mxu0
    %v192 = vadd.f32 0.0, %v191
    %v193 = vpop.f32.mrb[0].mxu0
    %194 = vdwg.mxu0
    %v195 = vmax.f32 %v192, 0.0
    %v196 = vld [vmem:[%s3 + $0x1] sm:$0x1]
    %v197 = vld [vmem:[%s3 + $0x2] sm:$0x1]
    %199 = vset.pattern.permute.xlu0 0
    %200 = vperm.xlu0 %199, %v197
    %v201 = vpop.permute.xlu0 %200
    %vm203 = vcmask 523264
    %v205 = vsel %vm203, %v196, 0
    %v208 = vsel %vm203, %v195, 0
    %210 = vmatprep.subr.mxu0 0.0
    %211 = vmatpush1.xpose.msra.mxu0 %v208
    %212 = vmatprep.subr.mxu0 0.0
    %213 = vmatpush1.xpose.msra.mxu0 0.0
    %214 = vmatprep.subr.mxu0 0.0
    %215 = vmatpush1.xpose.msra.mxu0 0.0
    %216 = vmatprep.subr.mxu0 0.0
    %217 = vmatpush1.xpose.msra.mxu0 0.0
    %218 = vmatprep.subr.mxu0 0.0
    %219 = vmatpush1.xpose.msra.mxu0 0.0
    %220 = vmatprep.subr.mxu0 0.0
    %221 = vmatpush1.xpose.msra.mxu0 0.0
    %222 = vmatprep.subr.mxu0 0.0
    %223 = vmatpush1.xpose.msra.mxu0 0.0
    %224 = vmatprep.subr.mxu0 0.0
    %225 = vmatpush1.xpose.msra.mxu0 0.0
    %226 = vmatprep.subr.mxu0 0.0
    %227 = vmatpush1.xpose.msra.mxu0 0.0
    %228 = vmatprep.subr.mxu0 0.0
    %229 = vmatpush1.xpose.msra.mxu0 0.0
    %230 = vmatprep.subr.mxu0 0.0
    %231 = vmatpush1.xpose.msra.mxu0 0.0
    %232 = vmatprep.subr.mxu0 0.0
    %233 = vmatpush1.xpose.msra.mxu0 0.0
    %234 = vmatprep.subr.mxu0 0.0
    %235 = vmatpush1.xpose.msra.mxu0 0.0
    %236 = vmatprep.subr.mxu0 0.0
    %237 = vmatpush1.xpose.msra.mxu0 0.0
    %238 = vmatprep.subr.mxu0 0.0
    %239 = vmatpush1.xpose.msra.mxu0 0.0
    %240 = vmatprep.subr.mxu0 0.0
    %241 = vmatpush1.xpose.msra.mxu0 0.0
    %242 = vmatprep.subr.mxu0 0.0
    %243 = vmatpush1.xpose.msra.mxu0 0.0
    %244 = vmatprep.subr.mxu0 0.0
    %245 = vmatpush1.xpose.msra.mxu0 0.0
    %246 = vmatprep.subr.mxu0 0.0
    %247 = vmatpush1.xpose.msra.mxu0 0.0
    %248 = vmatprep.subr.mxu0 0.0
    %249 = vmatpush1.xpose.msra.mxu0 0.0
    %250 = vmatprep.subr.mxu0 0.0
    %251 = vmatpush1.xpose.msra.mxu0 0.0
    %252 = vmatprep.subr.mxu0 0.0
    %253 = vmatpush1.xpose.msra.mxu0 0.0
    %254 = vmatprep.subr.mxu0 0.0
    %255 = vmatpush1.xpose.msra.mxu0 0.0
    %256 = vmatprep.subr.mxu0 0.0
    %257 = vmatpush1.xpose.msra.mxu0 0.0
    %258 = vmatprep.subr.mxu0 0.0
    %259 = vmatpush1.xpose.msra.mxu0 0.0
    %260 = vmatprep.subr.mxu0 0.0
    %261 = vmatpush1.xpose.msra.mxu0 0.0
    %262 = vmatprep.subr.mxu0 0.0
    %263 = vmatpush1.xpose.msra.mxu0 0.0
    %264 = vmatprep.subr.mxu0 0.0
    %265 = vmatpush1.xpose.msra.mxu0 0.0
    %266 = vmatprep.subr.mxu0 0.0
    %267 = vmatpush1.xpose.msra.mxu0 0.0
    %268 = vmatprep.subr.mxu0 0.0
    %269 = vmatpush1.xpose.msra.mxu0 0.0
    %270 = vmatprep.subr.mxu0 0.0
    %271 = vmatpush1.xpose.msra.mxu0 0.0
    %272 = vmatprep.subr.mxu0 0.0
    %273 = vmatpush1.xpose.msra.mxu0 0.0
    %274 = vmatprep.mubr.f32.mxu0 0.0
    %275 = vmatmul.mubr.f32.gmra.mrb[0].mxu0 %v205
    %v276 = vpop.f32.mrb[0].mxu0
    %v277 = vadd.f32 %v201, %v276
    %v278 = vpop.f32.mrb[0].mxu0
    %279 = vdwg.mxu0
    %vm280 = vcmask 57344
    %281 = vst.msk [vmem:[#allocation2] sm:$0x1] %vm280, %v277
    // Predicated region
    $region18: #{tpu_custom_call.1} parent=1 // pred_check
      _
    $region19: #{tpu_custom_call.1} parent=1 // pred_check_branch
      %283 = sbr.rel (0) target = $region21
    $region20: #{tpu_custom_call.1} parent=1 // pred_region
      %s285 = ssub.s32 16, 16
      %286 = vsyncadd [#allocation3], %s285
      %s288 = sshll.u32 [#allocation2], 4
      %s289 = int_to_ptr.vmem [resolvable:$true] %s288
      %291 = dma.vmem_to_hbm [thread:$0]  %s289, 16, %s4, [#allocation3]
    $region21: #{tpu_custom_call.1} parent=1 // pred_fallthru
      _
    // Predicated region
    $region22: #{tpu_custom_call.1} parent=1 // pred_check
      _
    $region23: #{tpu_custom_call.1} parent=1 // pred_check_branch
      %293 = sbr.rel (0) target = $region25
    $region24: #{tpu_custom_call.1} parent=1 // pred_region
      %294 = dma.done [#allocation3], 16
    $region25: #{tpu_custom_call.1} parent=1 // pred_fallthru
      _
    %295 = vsyncpa [#allocation3], 1

</llo_original>
